<compile_context>
chip_gen: v5e
topology: v5e:2x2
jax: 0.10.0
libtpu: 0.0.40
codegen_flags: <defaults>
</compile_context>

<pallas_src>
import functools

import jax
import jax.numpy as jnp
from jax.experimental import pallas as pl
from jax.experimental.pallas import tpu as pltpu

_MIB = 1024 * 1024


def _round_up(a, b):
    return ((a + b - 1) // b) * b


def _tpu_vmem_bytes():
    """Physical VMEM per TensorCore (128 MiB v5e/v6e, 64 MiB v7x); safe fallback."""
    try:
        cap = getattr(pltpu.get_tpu_info(), "vmem_capacity_bytes", None)
        if cap:
            return int(cap)
    except Exception:
        pass
    return 64 * _MIB  # conservative: v7x per-TC VMEM


def _choose_row_tile(n, block_n, sub):
    """Pick a row-tile size, preferring MXU-aligned divisors of n (avoids jnp.pad)."""
    n_sub = _round_up(n, sub)
    cap = max(sub, min(_round_up(block_n, sub), n_sub))
    # Prefer >= 2 row tiles so both v7x TensorCores get work when rows are plentiful.
    if n_sub <= cap and n_sub >= 2 * 128 and (n_sub // 2) % sub == 0:
        cap = n_sub // 2
    min_bn = min(cap, 128)
    for align in (256, 128, sub):            # MXU tile first, then sublane granularity
        if align % sub:
            continue
        for cand in range((cap // align) * align, align - 1, -align):
            if cand >= min_bn and n_sub % cand == 0:
                return cand, n_sub           # divides cleanly -> no padding copy
    # No clean divisor: fall back to padding with the largest tile.
    return cap, _round_up(n_sub, cap)


def _plan_tiles(n, d_model, d_ff, csize, osize, block_n, block_k, vmem_budget):
    """Return (bn, n_pad, bk, n_k, est_vmem_bytes)."""
    sub = 16 if csize < 4 else 8
    bn, n_pad = _choose_row_tile(n, block_n, sub)

    def usage(bn_, bk_, resident):
        b = 2 * bn_ * d_model * csize            # x row tile (double-buffered)
        b += 2 * bn_ * d_model * osize           # output tile
        b += 2 * (d_ff + d_model) * 4            # f32 biases (resident)
        b += 2 * d_model * bk_ * csize           # W1 chunk
        b += 2 * bk_ * d_model * csize           # W2 chunk
        if not resident:
            b += bn_ * d_model * 4               # f32 fc2 accumulator scratch
        return b

    while True:
        # (a) fully-resident weights -> W1/W2 fetched from HBM exactly once per call.
        u = usage(bn, d_ff, True)
        if u <= vmem_budget:
            return bn, n_pad, d_ff, 1, u
        # (b) stream d_ff in the largest 128-aligned chunk that fits and divides d_ff.
        top = min((block_k // 128) * 128, (d_ff // 128) * 128)
        for bk in range(top, 127, -128):
            u = usage(bn, bk, False)
            if d_ff % bk == 0 and u <= vmem_budget:
                return bn, n_pad, bk, d_ff // bk, u
        # (c) nothing fits -> halve the row tile and retry.
        if bn > sub:
            bn = max(sub, _round_up(bn // 2, sub))
            n_pad = _round_up(n, bn)
            continue
        # (d) last resort (awkward d_ff / tiny budget): keep the whole d_ff.
        # TODO(synk): support a ragged last d_ff chunk for d_ff not divisible by 128.
        return bn, n_pad, d_ff, 1, usage(bn, d_ff, True)


def _dropout_mask_apply(x, keep_p):
    """Apply inverted dropout to x using the already-seeded hardware PRNG."""
    # uint32 threshold clamp introduces a ~2^-32 keep-probability bias (negligible).
    thresh = jnp.uint32(min(int(keep_p * float(2 ** 32)), 2 ** 32 - 1))
    bits = pltpu.prng_random_bits(x.shape)
    if bits.dtype != jnp.uint32:
        bits = pltpu.bitcast(bits, jnp.uint32)
    return jnp.where(bits < thresh, x, 0.0) * (1.0 / keep_p)


def _ffn_kernel_resident(seed_ref, x_ref, w1_ref, b1_ref, w2_ref, b2_ref, o_ref, *,
                         dropout_p, training):
    """Single-pass kernel: full d_ff resident in VMEM (n_k == 1)."""
    apply_dropout = training and dropout_p > 0.0
    keep_p = 1.0 - dropout_p

    h = jnp.dot(x_ref[...], w1_ref[...], preferred_element_type=jnp.float32)
    h = jnp.maximum(h + b1_ref[...], 0.0)
    # Cast to the weight dtype so fc2 runs the full-rate (bf16) MXU path; dropout is
    # applied on the narrow tile (less VPU / vreg pressure).
    h = h.astype(w2_ref.dtype)
    if apply_dropout:
        pltpu.prng_seed(seed_ref[0] + pl.program_id(0))
        h = _dropout_mask_apply(h, keep_p)

    out = jnp.dot(h, w2_ref[...], preferred_element_type=jnp.float32) + b2_ref[...]
    if apply_dropout:
        pltpu.prng_seed(seed_ref[0] + pl.num_programs(0) + pl.program_id(0))
        out = _dropout_mask_apply(out, keep_p)
    o_ref[...] = out.astype(o_ref.dtype)


def _ffn_kernel_streamed(seed_ref, x_ref, w1_ref, b1_ref, w2_ref, b2_ref, o_ref,
                         acc_ref, *, dropout_p, training, n_k, bk):
    """d_ff streamed in chunks; f32 VMEM accumulator for fc2 (n_k > 1)."""
    k = pl.program_id(1)
    apply_dropout = training and dropout_p > 0.0
    keep_p = 1.0 - dropout_p

    # fc1 chunk: [bn, d_model] @ [d_model, bk] + bias slice, ReLU.
    h = jnp.dot(x_ref[...], w1_ref[...], preferred_element_type=jnp.float32)
    off = pl.multiple_of(k * bk, bk)
    h = jnp.maximum(h + b1_ref[:, pl.ds(off, bk)], 0.0)
    h = h.astype(w2_ref.dtype)
    if apply_dropout:
        # TODO(synk): adjacent integer seeds may yield correlated HW PRNG streams.
        pltpu.prng_seed(seed_ref[0] + pl.program_id(0) * n_k + k)
        h = _dropout_mask_apply(h, keep_p)

    # fc2 partial product; first k-step writes directly (saves a zero-init RMW).
    p = jnp.dot(h, w2_ref[...], preferred_element_type=jnp.float32)

    @pl.when(k == 0)
    def _():
        acc_ref[...] = p

    @pl.when(k > 0)
    def _():
        acc_ref[...] += p

    @pl.when(k == n_k - 1)
    def _():
        out = acc_ref[...] + b2_ref[...]
        if apply_dropout:
            pltpu.prng_seed(seed_ref[0] + pl.num_programs(0) * n_k + pl.program_id(0))
            out = _dropout_mask_apply(out, keep_p)
        o_ref[...] = out.astype(o_ref.dtype)


def feed_forward(x, w1, b1, w2, b2, *, dropout_p=0.1, training=False, seed=0,
                 block_n=512, block_k=2048, compute_dtype=None,
                 vmem_limit_bytes=None):
    """x: [..., d_model]; w1: (d_model, d_ff); w2: (d_ff, d_model). Returns x's shape/dtype.

    Pass compute_dtype=jnp.bfloat16 to cast x/W1/W2 once here for the full-rate bf16
    MXU path and half the weight HBM traffic (eval mode stays deterministic).
    """
    orig_shape = x.shape
    orig_dtype = x.dtype
    d_model = orig_shape[-1]
    d_ff = w1.shape[1]

    cdtype = jnp.dtype(compute_dtype) if compute_dtype is not None else jnp.dtype(orig_dtype)
    csize = cdtype.itemsize
    osize = jnp.dtype(orig_dtype).itemsize

    x2d = x.reshape(-1, d_model).astype(cdtype)
    n = x2d.shape[0]
    w1c = w1.astype(cdtype)
    w2c = w2.astype(cdtype)
    b1_2d = b1.reshape(1, d_ff).astype(jnp.float32)    # biases stay f32 (added to f32)
    b2_2d = b2.reshape(1, d_model).astype(jnp.float32)
    seed_arr = jnp.asarray([seed], dtype=jnp.int32)

    # Per-generation VMEM budget; never set the limit to the full physical VMEM
    # (v7x only has 64 MiB per TensorCore) -> headroom for Mosaic internal scratch.
    cap = _tpu_vmem_bytes()
    if vmem_limit_bytes is None:
        vmem_limit_bytes = int(cap * 0.85)
    budget = int(vmem_limit_bytes * 0.85)

    bn, n_pad, bk, n_k, est_bytes = _plan_tiles(
        n, d_model, d_ff, csize, osize, block_n, block_k, budget)
    vmem_limit_bytes = max(int(vmem_limit_bytes),
                           min(int(cap * 0.95), est_bytes + 8 * _MIB))

    if n_pad != n:
        # TODO(synk): mask the ragged last row tile instead of this HBM pad copy.
        x2d = jnp.pad(x2d, ((0, n_pad - n), (0, 0)))
    n_row_tiles = n_pad // bn

    nbytes = lambda a: a.size * a.dtype.itemsize
    w_bytes = nbytes(w1c) + nbytes(w2c)
    if n_k > 1:
        w_bytes *= n_row_tiles  # streamed weights are re-fetched per row tile
    cost = pl.CostEstimate(
        flops=2 * 2 * n_pad * d_model * d_ff,
        transcendentals=0,
        bytes_accessed=(nbytes(x2d) + n_pad * d_model * osize + w_bytes
                        + nbytes(b1_2d) + nbytes(b2_2d)),
    )

    if n_k == 1:
        # Resident-weight path: weight block indices are constant over the grid,
        # so W1/W2 are DMA'd from HBM exactly once for the whole call.
        kernel = functools.partial(_ffn_kernel_resident,
                                   dropout_p=float(dropout_p),
                                   training=bool(training))
        grid = (n_row_tiles,)
        in_specs = [
            pl.BlockSpec((bn, d_model), lambda i, s: (i, 0)),     # x row tile
            pl.BlockSpec((d_model, d_ff), lambda i, s: (0, 0)),   # W1 (resident)
            pl.BlockSpec((1, d_ff), lambda i, s: (0, 0)),         # b1
            pl.BlockSpec((d_ff, d_model), lambda i, s: (0, 0)),   # W2 (resident)
            pl.BlockSpec((1, d_model), lambda i, s: (0, 0)),      # b2
        ]
        out_specs = pl.BlockSpec((bn, d_model), lambda i, s: (i, 0))
        scratch_shapes = []
        dim_sem = ("parallel",)
    else:
        kernel = functools.partial(_ffn_kernel_streamed,
                                   dropout_p=float(dropout_p),
                                   training=bool(training), n_k=n_k, bk=bk)
        grid = (n_row_tiles, n_k)  # rows parallel, d_ff reduction axis last
        in_specs = [
            pl.BlockSpec((bn, d_model), lambda i, k, s: (i, 0)),   # x row tile
            pl.BlockSpec((d_model, bk), lambda i, k, s: (0, k)),   # W1 chunk
            pl.BlockSpec((1, d_ff), lambda i, k, s: (0, 0)),       # b1 fully resident
            pl.BlockSpec((bk, d_model), lambda i, k, s: (k, 0)),   # W2 chunk
            pl.BlockSpec((1, d_model), lambda i, k, s: (0, 0)),    # b2
        ]
        out_specs = pl.BlockSpec((bn, d_model), lambda i, k, s: (i, 0))
        scratch_shapes = [pltpu.VMEM((bn, d_model), jnp.float32)]  # fc2 accumulator
        dim_sem = ("parallel", "arbitrary")

    out2d = pl.pallas_call(
        kernel,
        out_shape=jax.ShapeDtypeStruct((n_pad, d_model), orig_dtype),
        grid_spec=pltpu.PrefetchScalarGridSpec(
            num_scalar_prefetch=1,          # seed lands in SMEM
            grid=grid,
            in_specs=in_specs,
            out_specs=out_specs,
            scratch_shapes=scratch_shapes,
        ),
        compiler_params=pltpu.CompilerParams(
            dimension_semantics=dim_sem,
            vmem_limit_bytes=int(vmem_limit_bytes),
        ),
        cost_estimate=cost,
    )(seed_arr, x2d, w1c, b1_2d, w2c, b2_2d)

    if n_pad != n:
        out2d = out2d[:n]
    return out2d.reshape(orig_shape)


def init_feed_forward_params(key, d_model, d_ff, dtype=jnp.float32):
    """Deterministic init matching torch.nn.Linear: U(-1/sqrt(fan_in), 1/sqrt(fan_in))."""
    k1, k2, k3, k4 = jax.random.split(key, 4)
    lim1 = 1.0 / (d_model ** 0.5)
    lim2 = 1.0 / (d_ff ** 0.5)
    # stored as (in_features, out_features)
    w1 = jax.random.uniform(k1, (d_model, d_ff), dtype, -lim1, lim1)
    b1 = jax.random.uniform(k2, (d_ff,), dtype, -lim1, lim1)
    w2 = jax.random.uniform(k3, (d_ff, d_model), dtype, -lim2, lim2)
    b2 = jax.random.uniform(k4, (d_model,), dtype, -lim2, lim2)
    return w1, b1, w2, b2


if __name__ == "__main__":
    key = jax.random.PRNGKey(0)
    kx, kp = jax.random.split(key)

    batch, seq, d_model, d_ff = 2, 8, 32, 64
    x = jax.random.normal(kx, (batch, seq, d_model), dtype=jnp.float32)
    w1, b1, w2, b2 = init_feed_forward_params(kp, d_model, d_ff)

    # Pure-JAX reference (eval mode: dropout = identity, matches PyTorch exactly).
    ref = jnp.maximum(x @ w1 + b1, 0.0) @ w2 + b2

    # f32 path: bit-for-bit semantics of the module in eval mode.
    out = feed_forward(x, w1, b1, w2, b2, dropout_p=0.1, training=False)
    out = jax.block_until_ready(out)
    assert out.shape == x.shape
    assert jnp.allclose(out, ref, atol=1e-5, rtol=1e-5), "f32 mismatch vs reference"

    # bf16 MXU path (recommended for perf): looser tolerance vs the f32 reference.
    out_bf16 = feed_forward(x, w1, b1, w2, b2, dropout_p=0.1, training=False,
                            compute_dtype=jnp.bfloat16)
    out_bf16 = jax.block_until_ready(out_bf16)
    assert out_bf16.shape == x.shape
    assert jnp.allclose(out_bf16.astype(jnp.float32), ref, atol=1e-1, rtol=1e-1), \
        "bf16 mismatch vs reference"

    print("KERNEL_OK")
</pallas_src>

<mosaic_0001>
module attributes {stable_mosaic.version = 11 : i64} {
  func.func @_ffn_kernel_resident(%arg0: i32, %arg1: memref<1xi32, #tpu.memory_space<smem>>, %arg2: memref<16x32xf32, #tpu.memory_space<vmem>>, %arg3: memref<32x64xf32, #tpu.memory_space<vmem>>, %arg4: memref<1x64xf32, #tpu.memory_space<vmem>>, %arg5: memref<64x32xf32, #tpu.memory_space<vmem>>, %arg6: memref<1x32xf32, #tpu.memory_space<vmem>>, %arg7: memref<16x32xf32, #tpu.memory_space<vmem>>) attributes {dimension_semantics = [#tpu.dimension_semantics<parallel>], iteration_bounds = array<i64: 1>, scalar_prefetch = 1 : i64, scratch_operands = 0 : i64, tpu.core_type = #tpu.core_type<tc>, window_params = [{transform_indices = @transform_0, window_bounds = array<i64: 16, 32>}, {pipeline_mode = #tpu.pipeline_mode<synchronous>, transform_indices = @transform_1, window_bounds = array<i64: 32, 64>}, {pipeline_mode = #tpu.pipeline_mode<synchronous>, transform_indices = @transform_2, window_bounds = array<i64: 1, 64>}, {pipeline_mode = #tpu.pipeline_mode<synchronous>, transform_indices = @transform_3, window_bounds = array<i64: 64, 32>}, {pipeline_mode = #tpu.pipeline_mode<synchronous>, transform_indices = @transform_4, window_bounds = array<i64: 1, 32>}, {transform_indices = @transform_5, window_bounds = array<i64: 16, 32>}]} {
    %c0 = arith.constant 0 : index
    %c0_0 = arith.constant 0 : index
    %0 = vector.load %arg2[%c0, %c0_0] : memref<16x32xf32, #tpu.memory_space<vmem>>, vector<16x32xf32>
    %c0_1 = arith.constant 0 : index
    %c0_2 = arith.constant 0 : index
    %1 = vector.load %arg3[%c0_1, %c0_2] : memref<32x64xf32, #tpu.memory_space<vmem>>, vector<32x64xf32>
    %cst = arith.constant dense<0.000000e+00> : vector<16x64xf32>
    %2 = tpu.matmul %0, %1, %cst {dimension_numbers = #tpu.dot_dimension_numbers<[1], [0], [0], [1], [0, 0, 1, 1], [], []>} : vector<16x32xf32>, vector<32x64xf32>, vector<16x64xf32> -> vector<16x64xf32>
    %c0_3 = arith.constant 0 : index
    %c0_4 = arith.constant 0 : index
    %3 = vector.load %arg4[%c0_3, %c0_4] : memref<1x64xf32, #tpu.memory_space<vmem>>, vector<1x64xf32>
    %4 = vector.broadcast %3 : vector<1x64xf32> to vector<16x64xf32>
    %5 = arith.addf %2, %4 : vector<16x64xf32>
    %cst_5 = arith.constant 0.000000e+00 : f32
    %6 = vector.broadcast %cst_5 : f32 to vector<16x64xf32>
    %7 = arith.maximumf %5, %6 : vector<16x64xf32>
    %c0_6 = arith.constant 0 : index
    %c0_7 = arith.constant 0 : index
    %8 = vector.load %arg5[%c0_6, %c0_7] : memref<64x32xf32, #tpu.memory_space<vmem>>, vector<64x32xf32>
    %cst_8 = arith.constant dense<0.000000e+00> : vector<16x32xf32>
    %9 = tpu.matmul %7, %8, %cst_8 {dimension_numbers = #tpu.dot_dimension_numbers<[1], [0], [0], [1], [0, 0, 1, 1], [], []>} : vector<16x64xf32>, vector<64x32xf32>, vector<16x32xf32> -> vector<16x32xf32>
    %c0_9 = arith.constant 0 : index
    %c0_10 = arith.constant 0 : index
    %10 = vector.load %arg6[%c0_9, %c0_10] : memref<1x32xf32, #tpu.memory_space<vmem>>, vector<1x32xf32>
    %11 = vector.broadcast %10 : vector<1x32xf32> to vector<16x32xf32>
    %12 = arith.addf %9, %11 : vector<16x32xf32>
    %c0_11 = arith.constant 0 : index
    %c0_12 = arith.constant 0 : index
    %13 = vector.load %arg7[%c0_11, %c0_12] : memref<16x32xf32, #tpu.memory_space<vmem>>, vector<16x32xf32>
    tpu.vector_store %arg7[%c0_11, %c0_12], %12 {strides = array<i32>} : memref<16x32xf32, #tpu.memory_space<vmem>>, vector<16x32xf32>,
    return
  }
  func.func @transform_0(%arg0: i32, %arg1: memref<1xi32, #tpu.memory_space<smem>>) -> (i32, i32) {
    %c0_i32 = arith.constant 0 : i32
    %c0_i32_0 = arith.constant 0 : i32
    return %arg0, %c0_i32 : i32, i32
  }
  func.func @transform_1(%arg0: i32, %arg1: memref<1xi32, #tpu.memory_space<smem>>) -> (i32, i32) {
    %c0_i32 = arith.constant 0 : i32
    %c0_i32_0 = arith.constant 0 : i32
    %c0_i32_1 = arith.constant 0 : i32
    return %c0_i32, %c0_i32_0 : i32, i32
  }
  func.func @transform_2(%arg0: i32, %arg1: memref<1xi32, #tpu.memory_space<smem>>) -> (i32, i32) {
    %c0_i32 = arith.constant 0 : i32
    %c0_i32_0 = arith.constant 0 : i32
    %c0_i32_1 = arith.constant 0 : i32
    return %c0_i32, %c0_i32_0 : i32, i32
  }
  func.func @transform_3(%arg0: i32, %arg1: memref<1xi32, #tpu.memory_space<smem>>) -> (i32, i32) {
    %c0_i32 = arith.constant 0 : i32
    %c0_i32_0 = arith.constant 0 : i32
    %c0_i32_1 = arith.constant 0 : i32
    return %c0_i32, %c0_i32_0 : i32, i32
  }
  func.func @transform_4(%arg0: i32, %arg1: memref<1xi32, #tpu.memory_space<smem>>) -> (i32, i32) {
    %c0_i32 = arith.constant 0 : i32
    %c0_i32_0 = arith.constant 0 : i32
    %c0_i32_1 = arith.constant 0 : i32
    return %c0_i32, %c0_i32_0 : i32, i32
  }
  func.func @transform_5(%arg0: i32, %arg1: memref<1xi32, #tpu.memory_space<smem>>) -> (i32, i32) {
    %c0_i32 = arith.constant 0 : i32
    %c0_i32_0 = arith.constant 0 : i32
    return %arg0, %c0_i32 : i32, i32
  }
}

</mosaic_0001>

<llo_original>
// kernel: tpu_custom_call.1
$region0: #{tpu_custom_call.1}
  #allocation0 [shape = 'u32[]', space=smem, size = 0x4, offset = 0x4, fixed_abs, tag = 'smem constant byte address 0x4 - core index']
  #allocation1 [shape = 'u32[72,128]{1,0:T(1,128)}', space=vmem, size = 0x9000, scoped, tag = 'internal scratch']
  #allocation2 [shape = 's32[1]{0}', space=sflag, size = 0x4, scoped, tag = 'scoped memory for tpu_custom_call.1']
  #allocation3 [shape = 's32[1]{0:T(128)S(6)}', space=smem, size = 0x200, scoped, tag = 'prefetched SMEM operand 0']
  %s0 = inlined_call_operand.<no memory space> [shape: s32[1], index: 0, kind: input, shape index: {}]
  %s1 = inlined_call_operand.vmem [shape: f32[16,32], index: 1, kind: input, shape index: {}]
  %s2 = inlined_call_operand.vmem [shape: f32[32,64], index: 2, kind: input, shape index: {}]
  %s3 = inlined_call_operand.vmem [shape: f32[1,64], index: 3, kind: input, shape index: {}]
  %s4 = inlined_call_operand.vmem [shape: f32[64,32], index: 4, kind: input, shape index: {}]
  %s5 = inlined_call_operand.vmem [shape: f32[1,32], index: 5, kind: input, shape index: {}]
  %s6 = inlined_call_operand.hbm [shape: f32[16,32], index: 6, kind: output, shape index: {}]
  %s7 = sld [smem:[#allocation0]]
  $region30: #{tpu_custom_call.1} parent=0
    _
  %s9 = ssub.s32 1, %s7
  %s10 = scalar_select 0, %s9, %s7
  %11 = sst [smem:[#allocation3]] %s0
  $region1: #{tpu_custom_call.1} parent=0
    #allocation4 [shape = 'u8[8192]{0}', space=vmem, size = 0x2000, scoped, tag = 'output window, operand 0, single buffered']
    #allocation5 [shape = 's32[1]{0}', space=sflag, size = 0x4, scoped, tag = 'scoped memory for tpu_custom_call.1']
    %12 = vsyncpa [#allocation5], 0
    // Predicated region
    $region2: #{tpu_custom_call.1} parent=1 // pred_check
      _
    $region3: #{tpu_custom_call.1} parent=1 // pred_check_branch
      %14 = sbr.rel (0) target = $region5
    $region4: #{tpu_custom_call.1} parent=1 // pred_region
      _
    $region5: #{tpu_custom_call.1} parent=1 // pred_fallthru
      _
    // Predicated region
    $region6: #{tpu_custom_call.1} parent=1 // pred_check
      _
    $region7: #{tpu_custom_call.1} parent=1 // pred_check_branch
      %16 = sbr.rel (0) target = $region9
    $region8: #{tpu_custom_call.1} parent=1 // pred_region
      _
    $region9: #{tpu_custom_call.1} parent=1 // pred_fallthru
      _
    // Predicated region
    $region10: #{tpu_custom_call.1} parent=1 // pred_check
      _
    $region11: #{tpu_custom_call.1} parent=1 // pred_check_branch
      %18 = sbr.rel (0) target = $region13
    $region12: #{tpu_custom_call.1} parent=1 // pred_region
      _
    $region13: #{tpu_custom_call.1} parent=1 // pred_fallthru
      _
    // Predicated region
    $region14: #{tpu_custom_call.1} parent=1 // pred_check
      _
    $region15: #{tpu_custom_call.1} parent=1 // pred_check_branch
      %20 = sbr.rel (0) target = $region17
    $region16: #{tpu_custom_call.1} parent=1 // pred_region
      _
    $region17: #{tpu_custom_call.1} parent=1 // pred_fallthru
      _
    // Predicated region
    $region18: #{tpu_custom_call.1} parent=1 // pred_check
      _
    $region19: #{tpu_custom_call.1} parent=1 // pred_check_branch
      %22 = sbr.rel (0) target = $region21
    $region20: #{tpu_custom_call.1} parent=1 // pred_region
      _
    $region21: #{tpu_custom_call.1} parent=1 // pred_fallthru
      _
    %v23 = vld [vmem:[%s1] sm:$0xff]
    %v24 = vld [vmem:[%s1 + $0x8] sm:$0xff]
    %v25 = vld [vmem:[%s2] sm:$0xff]
    %v26 = vld [vmem:[%s2 + $0x8] sm:$0xff]
    %v27 = vld [vmem:[%s2 + $0x10] sm:$0xff]
    %v28 = vld [vmem:[%s2 + $0x18] sm:$0xff]
    %v29 = vld [vmem:[%s3] sm:$0x1]
    %v31 = vperm.slane %v29, 0
    %vm33 = vcmask 261120
    %v35 = vsel %vm33, %v23, 0
    %v38 = vsel %vm33, %v24, 0
    %40 = vmatpush.msra.mxu0 0.0
    %41 = vmatpush.msra.mxu0 0.0
    %42 = vmatpush.msra.mxu0 0.0
    %43 = vmatpush.msra.mxu0 0.0
    %44 = vmatpush.msra.mxu0 0.0
    %45 = vmatpush.msra.mxu0 0.0
    %46 = vmatpush.msra.mxu0 0.0
    %47 = vmatpush.msra.mxu0 0.0
    %48 = vmatpush.msra.mxu0 0.0
    %49 = vmatpush.msra.mxu0 0.0
    %50 = vmatpush.msra.mxu0 0.0
    %51 = vmatpush.msra.mxu0 0.0
    %52 = vmatpush.msra.mxu0 %v28
    %53 = vmatpush.msra.mxu0 %v27
    %54 = vmatpush.msra.mxu0 %v26
    %55 = vmatpush.msra.mxu0 %v25
    %56 = vmatmul.f32.gmra.mxu0 %v35
    %v57 = vpop.f32.mrf.mxu0
    %v58 = vadd.f32 %v31, %v57
    %59 = vmatmul.f32.gmra.mxu0 %v38
    %v60 = vpop.f32.mrf.mxu0
    %v61 = vadd.f32 %v31, %v60
    %62 = vdwg.mxu0
    %v63 = vmax.f32 %v58, 0.0
    %v64 = vmax.f32 %v61, 0.0
    %v65 = vld [vmem:[%s4] sm:$0xff]
    %v66 = vld [vmem:[%s4 + $0x8] sm:$0xff]
    %v67 = vld [vmem:[%s4 + $0x10] sm:$0xff]
    %v68 = vld [vmem:[%s4 + $0x18] sm:$0xff]
    %v69 = vld [vmem:[%s4 + $0x20] sm:$0xff]
    %v70 = vld [vmem:[%s4 + $0x28] sm:$0xff]
    %v71 = vld [vmem:[%s4 + $0x30] sm:$0xff]
    %v72 = vld [vmem:[%s4 + $0x38] sm:$0xff]
    %v73 = vld [vmem:[%s5] sm:$0x1]
    %v75 = vperm.slane %v73, 0
    %vm77 = vcmask 523264
    %v79 = vsel %vm77, %v63, 0
    %v82 = vsel %vm77, %v64, 0
    %84 = vmatpush.msra.mxu0 0.0
    %85 = vmatpush.msra.mxu0 0.0
    %86 = vmatpush.msra.mxu0 0.0
    %87 = vmatpush.msra.mxu0 0.0
    %88 = vmatpush.msra.mxu0 0.0
    %89 = vmatpush.msra.mxu0 0.0
    %90 = vmatpush.msra.mxu0 0.0
    %91 = vmatpush.msra.mxu0 0.0
    %92 = vmatpush.msra.mxu0 %v72
    %93 = vmatpush.msra.mxu0 %v71
    %94 = vmatpush.msra.mxu0 %v70
    %95 = vmatpush.msra.mxu0 %v69
    %96 = vmatpush.msra.mxu0 %v68
    %97 = vmatpush.msra.mxu0 %v67
    %98 = vmatpush.msra.mxu0 %v66
    %99 = vmatpush.msra.mxu0 %v65
    %100 = vmatmul.f32.gmra.mxu0 %v79
    %v101 = vpop.f32.mrf.mxu0
    %v102 = vadd.f32 %v75, %v101
    %103 = vmatmul.f32.gmra.mxu0 %v82
    %v104 = vpop.f32.mrf.mxu0
    %v105 = vadd.f32 %v75, %v104
    %106 = vdwg.mxu0
    %107 = vst.msk [vmem:[#allocation4] sm:$0xff] %vm33, %v102
    %108 = vst.msk [vmem:[#allocation4 + $0x8] sm:$0xff] %vm33, %v105
    // Predicated region
    $region22: #{tpu_custom_call.1} parent=1 // pred_check
      _
    $region23: #{tpu_custom_call.1} parent=1 // pred_check_branch
      %110 = sbr.rel (0) target = $region25
    $region24: #{tpu_custom_call.1} parent=1 // pred_region
      %112 = vsyncadd [#allocation5], 0
      %s113 = sshll.u32 [#allocation4], 4
      %s114 = int_to_ptr.vmem [resolvable:$true] %s113
      %s115 = sshll.u32 %s6, 4
      %s116 = int_to_ptr.hbm [resolvable:$true] %s115
      %121 = dma.vmem_to_hbm [thread:$0]  %s114, 256, %s116, [#allocation5], 128, 128, 8
    $region25: #{tpu_custom_call.1} parent=1 // pred_fallthru
      _
    // Predicated region
    $region26: #{tpu_custom_call.1} parent=1 // pred_check
      _
    $region27: #{tpu_custom_call.1} parent=1 // pred_check_branch
      %123 = sbr.rel (0) target = $region29
    $region28: #{tpu_custom_call.1} parent=1 // pred_region
      %125 = dma.done [#allocation5], 256
    $region29: #{tpu_custom_call.1} parent=1 // pred_fallthru
      _
    %126 = vsyncpa [#allocation5], 1

</llo_original>
